<compile_context>
chip_gen: v5e
topology: v5e:2x2
jax: 0.10.0
libtpu: 0.0.40
codegen_flags: <defaults>
</compile_context>

<pallas_src>
import functools
import math

import jax
import jax.numpy as jnp
from jax.experimental import pallas as pl
from jax.experimental.pallas import tpu as pltpu

_VMEM_LIMIT = 48 * 1024 * 1024   # explicit scoped-VMEM cap (fits v7x's 64 MiB)


def _round_up(x, m):
    return -(-x // m) * m


def _compiler_params(dims):
    return pltpu.CompilerParams(dimension_semantics=dims,
                                vmem_limit_bytes=_VMEM_LIMIT)


def _pick_seq_tile(s):
    for t in (1024, 512, 256, 128):
        if s >= t and s % t == 0:
            return t
    return s   # small (or odd) sequence: single full-extent block


def _pick_tile(dim, choices=(512, 256, 128)):
    if dim <= choices[0]:
        return dim
    for c in choices:
        if dim % c == 0:
            return c
    return choices[-1]


# ---------------------------------------------------------------------------
# Generic tiled matmul with fused bias (used by 1x1 convs / linears)
# ---------------------------------------------------------------------------


def _matmul_bias_kernel(a_ref, b_ref, bias_ref, o_ref, acc_ref):
    @pl.when(pl.program_id(2) == 0)
    def _():
        acc_ref[...] = jnp.zeros_like(acc_ref)

    acc_ref[...] += jnp.dot(a_ref[...], b_ref[...],
                            preferred_element_type=jnp.float32)

    @pl.when(pl.program_id(2) == pl.num_programs(2) - 1)
    def _():
        o_ref[...] = (acc_ref[...] + bias_ref[...].astype(jnp.float32)
                      ).astype(o_ref.dtype)


@functools.partial(jax.jit, static_argnames=("out_dtype",))
def pallas_matmul(a, b, bias=None, out_dtype=jnp.bfloat16):
    """(M,K) @ (K,N) + bias.  bf16 MXU operands, f32 accumulation, fused bias."""
    M, K = a.shape
    K2, N = b.shape
    assert K == K2
    a = a.astype(jnp.bfloat16)
    b = b.astype(jnp.bfloat16)
    if bias is None:
        bias = jnp.zeros((N,), jnp.float32)
    bias2 = bias.reshape(1, N).astype(jnp.float32)

    tm = _pick_tile(_round_up(M, 8))
    tk = _pick_tile(K)
    tn = _pick_tile(N)
    Mp, Kp, Np = _round_up(M, tm), _round_up(K, tk), _round_up(N, tn)
    if Mp != M:
        a = jnp.pad(a, ((0, Mp - M), (0, 0)))
    if Kp != K:
        a = jnp.pad(a, ((0, 0), (0, Kp - K)))
        b = jnp.pad(b, ((0, Kp - K), (0, 0)))
    if Np != N:
        b = jnp.pad(b, ((0, 0), (0, Np - N)))
        bias2 = jnp.pad(bias2, ((0, 0), (0, Np - N)))

    out = pl.pallas_call(
        _matmul_bias_kernel,
        out_shape=jax.ShapeDtypeStruct((Mp, Np), out_dtype),
        grid_spec=pltpu.PrefetchScalarGridSpec(
            num_scalar_prefetch=0,
            grid=(Mp // tm, Np // tn, Kp // tk),
            in_specs=[pl.BlockSpec((tm, tk), lambda i, j, k: (i, k)),
                      pl.BlockSpec((tk, tn), lambda i, j, k: (k, j)),
                      pl.BlockSpec((1, tn), lambda i, j, k: (0, j))],
            out_specs=pl.BlockSpec((tm, tn), lambda i, j, k: (i, j)),
            scratch_shapes=[pltpu.VMEM((tm, tn), jnp.float32)]),
        compiler_params=_compiler_params(("parallel", "parallel", "arbitrary")),
    )(a, b, bias2)
    if Mp != M or Np != N:
        out = out[:M, :N]
    return out


# ---------------------------------------------------------------------------
# Fused 3x3 spatial conv (no im2col in HBM)
# ---------------------------------------------------------------------------


def _conv3x3_kernel(x0_ref, x1_ref, x2_ref, w_ref, b_ref, o_ref, *, width):
    rows = (x0_ref, x1_ref, x2_ref)              # three dy-shifted row blocks
    acc = None
    for dy in range(3):
        for dx in range(3):
            a = rows[dy][0, 0, dx:dx + width, :]          # (W, Cin) bf16
            p = jnp.dot(a, w_ref[dy, dx],
                        preferred_element_type=jnp.float32)
            acc = p if acc is None else acc + p
    o_ref[0, 0] = (acc + b_ref[...].astype(jnp.float32)).astype(o_ref.dtype)


@functools.partial(jax.jit, static_argnames=("out_dtype",))
def conv2d_3x3(x, w, b, out_dtype=jnp.bfloat16):
    """x: (N,H,W,Cin); w: (3,3,Cin,Cout); b: (Cout,).  stride 1, pad 1.

    The three dy taps come in as three row-shifted (1,1,W+2,Cin) BlockSpecs on
    the padded input; the three dx taps are static shifts in-kernel; bias and
    bf16 cast are fused into the epilogue.  No patches tensor is materialized.
    """
    N, H, W, Cin = x.shape
    Cout = w.shape[-1]
    xp = jnp.pad(x.astype(jnp.bfloat16), ((0, 0), (1, 1), (1, 1), (0, 0)))

    def row_spec(dy):
        return pl.BlockSpec((1, 1, W + 2, Cin),
                            lambda n, h, dy=dy: (n, h + dy, 0, 0))

    kern = functools.partial(_conv3x3_kernel, width=W)
    return pl.pallas_call(
        kern,
        out_shape=jax.ShapeDtypeStruct((N, H, W, Cout), out_dtype),
        grid_spec=pltpu.PrefetchScalarGridSpec(
            num_scalar_prefetch=0,
            grid=(N, H),
            in_specs=[row_spec(0), row_spec(1), row_spec(2),
                      pl.BlockSpec((3, 3, Cin, Cout),
                                   lambda n, h: (0, 0, 0, 0)),
                      pl.BlockSpec((1, Cout), lambda n, h: (0, 0))],
            out_specs=pl.BlockSpec((1, 1, W, Cout), lambda n, h: (n, h, 0, 0))),
        compiler_params=_compiler_params(("parallel", "parallel")),
    )(xp, xp, xp, w.astype(jnp.bfloat16),
      b.reshape(1, Cout).astype(jnp.float32))


# ---------------------------------------------------------------------------
# Fused (3,1,1) temporal conv
# ---------------------------------------------------------------------------


def _conv_temporal_kernel(x0_ref, x1_ref, x2_ref, w_ref, b_ref, o_ref):
    acc = jnp.dot(x0_ref[0, 0], w_ref[0], preferred_element_type=jnp.float32)
    acc = acc + jnp.dot(x1_ref[0, 0], w_ref[1],
                        preferred_element_type=jnp.float32)
    acc = acc + jnp.dot(x2_ref[0, 0], w_ref[2],
                        preferred_element_type=jnp.float32)
    o_ref[0, 0] = (acc + b_ref[...].astype(jnp.float32)).astype(o_ref.dtype)


@functools.partial(jax.jit, static_argnames=("out_dtype",))
def conv_temporal_311(x, w, b, out_dtype=jnp.bfloat16):
    """Conv3d kernel (3,1,1), padding (1,0,0).  x: (B,T,H,W,C); w: (3,Cin,Cout).
    The three time taps are frame-shifted BlockSpecs; bias fused in epilogue."""
    B, T, H, W, C = x.shape
    Cout = w.shape[-1]
    xp = jnp.pad(x.astype(jnp.bfloat16),
                 ((0, 0), (1, 1), (0, 0), (0, 0), (0, 0)))
    S = H * W
    xp = xp.reshape(B, T + 2, S, C)
    tp = _pick_seq_tile(S)

    def tap_spec(dt):
        return pl.BlockSpec((1, 1, tp, C),
                            lambda bb, t, p, dt=dt: (bb, t + dt, p, 0))

    out = pl.pallas_call(
        _conv_temporal_kernel,
        out_shape=jax.ShapeDtypeStruct((B, T, S, Cout), out_dtype),
        grid_spec=pltpu.PrefetchScalarGridSpec(
            num_scalar_prefetch=0,
            grid=(B, T, S // tp),
            in_specs=[tap_spec(0), tap_spec(1), tap_spec(2),
                      pl.BlockSpec((3, C, Cout), lambda bb, t, p: (0, 0, 0)),
                      pl.BlockSpec((1, Cout), lambda bb, t, p: (0, 0))],
            out_specs=pl.BlockSpec((1, 1, tp, Cout),
                                   lambda bb, t, p: (bb, t, p, 0))),
        compiler_params=_compiler_params(("parallel", "parallel", "parallel")),
    )(xp, xp, xp, w.astype(jnp.bfloat16),
      b.reshape(1, Cout).astype(jnp.float32))
    return out.reshape(B, T, H, W, Cout)


# ---------------------------------------------------------------------------
# Tiled GroupNorm (+ optional SiLU): two passes with f32 accumulation
# ---------------------------------------------------------------------------


def _gn_stats_kernel(x_ref, s_ref):
    @pl.when(pl.program_id(1) == 0)
    def _():
        s_ref[...] = jnp.zeros_like(s_ref)

    x = x_ref[0].astype(jnp.float32)                       # (ts, C)
    s_ref[0, 0:1, :] += jnp.sum(x, axis=0, keepdims=True)
    s_ref[0, 1:2, :] += jnp.sum(x * x, axis=0, keepdims=True)


def _gn_apply_kernel(x_ref, sc_ref, sh_ref, o_ref, *, silu):
    y = x_ref[0].astype(jnp.float32) * sc_ref[...] + sh_ref[...]
    if silu:
        y = y * jax.nn.sigmoid(y)
    o_ref[0] = y.astype(o_ref.dtype)


@functools.partial(jax.jit,
                   static_argnames=("groups", "eps", "silu", "out_dtype"))
def group_norm_seq(x, gamma, beta, *, groups, eps, silu,
                   out_dtype=jnp.bfloat16):
    """GroupNorm over (sequence, channel-group) per sample.  x: (N, S, C)."""
    N, S, C = x.shape
    ts = _pick_seq_tile(S)

    sums = pl.pallas_call(
        _gn_stats_kernel,
        out_shape=jax.ShapeDtypeStruct((N, 2, C), jnp.float32),
        grid_spec=pltpu.PrefetchScalarGridSpec(
            num_scalar_prefetch=0,
            grid=(N, S // ts),
            in_specs=[pl.BlockSpec((1, ts, C), lambda n, s: (n, s, 0))],
            out_specs=pl.BlockSpec((1, 2, C), lambda n, s: (n, 0, 0))),
        compiler_params=_compiler_params(("parallel", "arbitrary")),
    )(x)

    cg = C // groups
    gsum = sums.reshape(N, 2, groups, cg).sum(axis=-1)     # (N, 2, G) -- tiny
    count = float(S * cg)
    mean = gsum[:, 0, :] / count
    var = jnp.maximum(gsum[:, 1, :] / count - mean * mean, 0.0)   # clamp >= 0
    inv = jax.lax.rsqrt(var + eps)
    mean_c = jnp.repeat(mean, cg, axis=-1)                 # (N, C)
    inv_c = jnp.repeat(inv, cg, axis=-1)
    scale = (inv_c * gamma[None, :]).astype(jnp.float32)
    shift = (beta[None, :] - mean_c * inv_c * gamma[None, :]).astype(jnp.float32)

    return pl.pallas_call(
        functools.partial(_gn_apply_kernel, silu=silu),
        out_shape=jax.ShapeDtypeStruct((N, S, C), out_dtype),
        grid_spec=pltpu.PrefetchScalarGridSpec(
            num_scalar_prefetch=0,
            grid=(N, S // ts),
            in_specs=[pl.BlockSpec((1, ts, C), lambda n, s: (n, s, 0)),
                      pl.BlockSpec((1, C), lambda n, s: (n, 0)),
                      pl.BlockSpec((1, C), lambda n, s: (n, 0))],
            out_specs=pl.BlockSpec((1, ts, C), lambda n, s: (n, s, 0))),
        compiler_params=_compiler_params(("parallel", "parallel")),
    )(x, scale, shift)


def gn_nhwc(x, g, b, groups, eps, silu, out_dtype=jnp.bfloat16):
    N, H, W, C = x.shape
    y = group_norm_seq(x.reshape(N, H * W, C), g, b,
                       groups=groups, eps=eps, silu=silu, out_dtype=out_dtype)
    return y.reshape(N, H, W, C)


# ---------------------------------------------------------------------------
# Flash-style single-head attention (online softmax over KV tiles)
# ---------------------------------------------------------------------------


def _flash_attn_kernel(q_ref, k_ref, v_ref, o_ref, m_sc, l_sc, acc_sc):
    kv = pl.program_id(2)

    @pl.when(kv == 0)
    def _():
        m_sc[...] = jnp.full_like(m_sc, -1e30)
        l_sc[...] = jnp.zeros_like(l_sc)
        acc_sc[...] = jnp.zeros_like(acc_sc)

    s = jax.lax.dot_general(q_ref[0], k_ref[0], (((1,), (1,)), ((), ())),
                            preferred_element_type=jnp.float32)   # (tq, tkv)
    m_prev = m_sc[...]
    m_new = jnp.maximum(m_prev, jnp.max(s, axis=-1, keepdims=True))
    alpha = jnp.exp(m_prev - m_new)
    p = jnp.exp(s - m_new)
    l_sc[...] = alpha * l_sc[...] + jnp.sum(p, axis=-1, keepdims=True)
    acc_sc[...] = alpha * acc_sc[...] + jnp.dot(
        p.astype(v_ref.dtype), v_ref[0], preferred_element_type=jnp.float32)
    m_sc[...] = m_new

    @pl.when(kv == pl.num_programs(2) - 1)
    def _():
        o_ref[0] = (acc_sc[...] * pl.reciprocal(l_sc[...], approx=True)
                    ).astype(o_ref.dtype)


@functools.partial(jax.jit, static_argnames=("out_dtype",))
def pallas_attention(q, k, v, out_dtype=jnp.bfloat16):
    """Single-head attention; 1/sqrt(d) scale folded into the Q projection."""
    B, S, D = q.shape
    tq = min(S, 256)
    tkv = min(S, 512)
    if S % tq or S % tkv:
        tq = tkv = S   # TODO(synk): ragged sequence tiling
    q = q.astype(jnp.bfloat16)
    k = k.astype(jnp.bfloat16)
    v = v.astype(jnp.bfloat16)
    q_spec = pl.BlockSpec((1, tq, D), lambda b, i, j: (b, i, 0))
    kv_spec = pl.BlockSpec((1, tkv, D), lambda b, i, j: (b, j, 0))
    return pl.pallas_call(
        _flash_attn_kernel,
        out_shape=jax.ShapeDtypeStruct((B, S, D), out_dtype),
        grid_spec=pltpu.PrefetchScalarGridSpec(
            num_scalar_prefetch=0,
            grid=(B, S // tq, S // tkv),
            in_specs=[q_spec, kv_spec, kv_spec],
            out_specs=q_spec,
            scratch_shapes=[pltpu.VMEM((tq, 1), jnp.float32),
                            pltpu.VMEM((tq, 1), jnp.float32),
                            pltpu.VMEM((tq, D), jnp.float32)]),
        compiler_params=_compiler_params(("parallel", "parallel", "arbitrary")),
    )(q, k, v)


# ---------------------------------------------------------------------------
# Thin wrappers
# ---------------------------------------------------------------------------


def conv2d_1x1(x, w, b=None, out_dtype=jnp.bfloat16):
    """x: (N,H,W,Cin); w: (Cin, Cout) pre-transposed."""
    N, H, W, Cin = x.shape
    Cout = w.shape[-1]
    y = pallas_matmul(x.reshape(N * H * W, Cin), w, b, out_dtype=out_dtype)
    return y.reshape(N, H, W, Cout)


def linear(x, w, b, out_dtype=jnp.bfloat16):
    """x: (M, in); w: (in, out) pre-transposed."""
    return pallas_matmul(x, w, b, out_dtype=out_dtype)


# ---------------------------------------------------------------------------
# Sub-blocks (diffusers SVD temporal-decoder semantics)
# ---------------------------------------------------------------------------


def spatial_resnet(x, p, groups):
    h = gn_nhwc(x, p["n1_g"], p["n1_b"], groups, 1e-6, silu=True)
    h = conv2d_3x3(h, p["c1_w"], p["c1_b"])
    h = gn_nhwc(h, p["n2_g"], p["n2_b"], groups, 1e-6, silu=True)
    h = conv2d_3x3(h, p["c2_w"], p["c2_b"])
    if "sc_w" in p:
        x = conv2d_1x1(x, p["sc_w"], p["sc_b"])
    return (x + h).astype(jnp.bfloat16)


def temporal_resnet(x5, p, groups):
    B, T, H, W, C = x5.shape

    def gn(y, g, b):
        z = group_norm_seq(y.reshape(B, T * H * W, C), g, b,
                           groups=groups, eps=1e-5, silu=True)
        return z.reshape(B, T, H, W, C)

    h = gn(x5, p["n1_g"], p["n1_b"])
    h = conv_temporal_311(h, p["c1_w"], p["c1_b"])
    h = gn(h, p["n2_g"], p["n2_b"])
    h = conv_temporal_311(h, p["c2_w"], p["c2_b"])
    return (x5 + h).astype(jnp.bfloat16)


def st_resblock(x, p, num_frames, groups):
    x = spatial_resnet(x, p["spatial"], groups)
    BF, H, W, C = x.shape
    B = BF // num_frames
    x5 = x.reshape(B, num_frames, H, W, C)
    x_temp = temporal_resnet(x5, p["temporal"], groups)
    alpha = jax.nn.sigmoid(p["mix_factor"])          # merge_strategy="learned"
    alpha = 1.0 - alpha                              # switch_spatial_to_temporal
    x_mix = (alpha * x5.astype(jnp.float32)
             + (1.0 - alpha) * x_temp.astype(jnp.float32)).astype(jnp.bfloat16)
    return x_mix.reshape(BF, H, W, C)


def attention_block(x, p, groups):
    BF, H, W, C = x.shape
    residual = x
    seq = group_norm_seq(x.reshape(BF, H * W, C), p["gn_g"], p["gn_b"],
                         groups=groups, eps=1e-6, silu=False)
    flat = seq.reshape(BF * H * W, C)
    q = linear(flat, p["q_w"], p["q_b"]).reshape(BF, H * W, C)  # scale folded
    k = linear(flat, p["k_w"], p["k_b"]).reshape(BF, H * W, C)
    v = linear(flat, p["v_w"], p["v_b"]).reshape(BF, H * W, C)
    o = pallas_attention(q, k, v)
    o = linear(o.reshape(BF * H * W, C), p["o_w"], p["o_b"])
    return (o.reshape(BF, H, W, C) + residual).astype(jnp.bfloat16)


def mid_block_forward(x, p, num_frames, groups):
    x = st_resblock(x, p["resnets"][0], num_frames, groups)
    for resnet, attn in zip(p["resnets"][1:], p["attentions"]):
        x = attention_block(x, attn, groups)
        x = st_resblock(x, resnet, num_frames, groups)
    return x


def up_block_forward(x, p, num_frames, groups):
    for r in p["resnets"]:
        x = st_resblock(x, r, num_frames, groups)
    if "upsampler" in p:
        # TODO(synk): fuse the nearest-2x upsample into the next conv's
        # index_map instead of materializing the repeated tensor.
        x = jnp.repeat(jnp.repeat(x, 2, axis=1), 2, axis=2)
        x = conv2d_3x3(x, p["upsampler"]["w"], p["upsampler"]["b"])
    return x


# ---------------------------------------------------------------------------
# TemporalDecoder forward
# ---------------------------------------------------------------------------


def temporal_decoder_forward(params, cfg, sample, image_only_indicator,
                             num_frames=1, encoder_residual=None,
                             start_frame=0):
    """sample: (batch_frames, Cin, H, W) NCHW -> (batch_frames, Cout, 8H, 8W)."""
    groups = cfg["norm_groups"]
    nf = image_only_indicator.shape[-1]
    # TODO(synk): image_only_indicator is only used for its frame count here;
    # per-frame spatial/temporal gating of the mixer is not modelled.

    x = jnp.transpose(sample, (0, 2, 3, 1))                   # NCHW -> NHWC
    x = conv2d_3x3(x, params["conv_in_w"], params["conv_in_b"])
    x = mid_block_forward(x, params["mid"], nf, groups)

    residuals_rev = encoder_residual[::-1]
    for idx, ub in enumerate(params["up_blocks"]):
        r = residuals_rev[idx][start_frame:start_frame + num_frames]   # NCHW
        r = jnp.transpose(r, (0, 2, 3, 1))
        skip_in = conv2d_1x1(r, params["skip_convs"][idx], None)       # no bias
        x = (x + skip_in).astype(jnp.bfloat16)
        x = up_block_forward(x, ub, nf, groups)

    # conv_norm_out + conv_act(SiLU) fused into one tiled GroupNorm
    x = gn_nhwc(x, params["gn_out_g"], params["gn_out_b"], groups, 1e-6,
                silu=True)
    x = conv2d_3x3(x, params["conv_out_w"], params["conv_out_b"])

    BF, H, W, C = x.shape
    B = BF // num_frames
    x5 = x.reshape(B, num_frames, H, W, C)
    x5 = conv_temporal_311(x5, params["time_conv_w"], params["time_conv_b"],
                           out_dtype=jnp.float32)
    x = x5.reshape(BF, H, W, C)
    return jnp.transpose(x, (0, 3, 1, 2))                     # back to NCHW


# ---------------------------------------------------------------------------
# Deterministic parameter construction (kernel-friendly layouts at init)
# ---------------------------------------------------------------------------


class _KeyGen:
    def __init__(self, key):
        self.key = key

    def __call__(self):
        self.key, sub = jax.random.split(self.key)
        return sub


def _norm_params(c):
    return jnp.ones((c,), jnp.float32), jnp.zeros((c,), jnp.float32)


def _conv3x3_params(kg, cin, cout, scale=0.05):
    # torch layout (Cout, Cin, 3, 3) pre-transposed once to (3, 3, Cin, Cout)
    w = scale * jax.random.normal(kg(), (3, 3, cin, cout), jnp.float32)
    return w.astype(jnp.bfloat16), jnp.zeros((cout,), jnp.float32)


def _convt3_params(kg, cin, cout, scale=0.05):
    # torch Conv3d (Cout, Cin, 3, 1, 1) pre-transposed to (3, Cin, Cout)
    w = scale * jax.random.normal(kg(), (3, cin, cout), jnp.float32)
    return w.astype(jnp.bfloat16), jnp.zeros((cout,), jnp.float32)


def _init_st_block(kg, cin, cout, scale=0.05):
    sp = {}
    sp["n1_g"], sp["n1_b"] = _norm_params(cin)
    sp["c1_w"], sp["c1_b"] = _conv3x3_params(kg, cin, cout, scale)
    sp["n2_g"], sp["n2_b"] = _norm_params(cout)
    sp["c2_w"], sp["c2_b"] = _conv3x3_params(kg, cout, cout, scale)
    if cin != cout:
        sp["sc_w"] = (scale * jax.random.normal(kg(), (cin, cout), jnp.float32)
                      ).astype(jnp.bfloat16)
        sp["sc_b"] = jnp.zeros((cout,), jnp.float32)
    tp = {}
    tp["n1_g"], tp["n1_b"] = _norm_params(cout)
    tp["c1_w"], tp["c1_b"] = _convt3_params(kg, cout, cout, scale)
    tp["n2_g"], tp["n2_b"] = _norm_params(cout)
    tp["c2_w"], tp["c2_b"] = _convt3_params(kg, cout, cout, scale)
    return {"spatial": sp, "temporal": tp,
            "mix_factor": jnp.zeros((), jnp.float32)}   # merge_factor = 0.0


def _init_attention(kg, c, scale=0.05):
    p = {}
    p["gn_g"], p["gn_b"] = _norm_params(c)
    attn_scale = 1.0 / math.sqrt(c)
    for name in ("q", "k", "v", "o"):
        w = scale * jax.random.normal(kg(), (c, c), jnp.float32)   # (in, out)
        b = jnp.zeros((c,), jnp.float32)
        if name == "q":            # fold 1/sqrt(d) softmax scale into Q proj
            w = w * attn_scale
            b = b * attn_scale
        p[name + "_w"] = w.astype(jnp.bfloat16)
        p[name + "_b"] = b
    return p


def init_temporal_decoder(key, cfg):
    kg = _KeyGen(key)
    boc = cfg["block_out_channels"]
    lpb = cfg["layers_per_block"]
    cin, cout = cfg["in_channels"], cfg["out_channels"]
    rev = list(reversed(boc))
    P = {}
    P["conv_in_w"], P["conv_in_b"] = _conv3x3_params(kg, cin, boc[-1])

    P["mid"] = {
        "resnets": [_init_st_block(kg, boc[-1], boc[-1]) for _ in range(lpb)],
        "attentions": [_init_attention(kg, boc[-1])]}

    ups = []
    prev = rev[0]
    for i in range(len(boc)):
        out_ch = rev[i]
        blocks = []
        for j in range(lpb + 1):
            in_ch = prev if j == 0 else out_ch
            blocks.append(_init_st_block(kg, in_ch, out_ch))
        ub = {"resnets": blocks}
        if i != len(boc) - 1:
            uw, ubias = _conv3x3_params(kg, out_ch, out_ch)
            ub["upsampler"] = {"w": uw, "b": ubias}
        ups.append(ub)
        prev = out_ch
    P["up_blocks"] = ups

    P["gn_out_g"], P["gn_out_b"] = _norm_params(boc[0])
    P["conv_out_w"], P["conv_out_b"] = _conv3x3_params(kg, boc[0], cout)
    P["time_conv_w"], P["time_conv_b"] = _convt3_params(kg, cout, cout)

    # skip convs: same pattern as the reference (512/256/128/128 -> 512/512/
    # 512/256) scaled with block_out_channels; constant 1e-5 init, no bias.
    skip_in_ch = [boc[2], boc[1], boc[0], boc[0]]
    skip_out_ch = [boc[-1], rev[0], rev[1], rev[2]]
    P["skip_convs"] = [jnp.full((skip_in_ch[i], skip_out_ch[i]), 1e-5,
                                jnp.bfloat16) for i in range(4)]
    return P


# ---------------------------------------------------------------------------
# Demo
# ---------------------------------------------------------------------------

if __name__ == "__main__":
    cfg = dict(in_channels=4, out_channels=3,
               block_out_channels=(32, 64, 128, 128),
               layers_per_block=2,
               norm_groups=8)

    batch_size, num_frames = 1, 2
    H0 = W0 = 4
    batch_frames = batch_size * num_frames

    key = jax.random.PRNGKey(0)
    k_param, k_in, k_r0, k_r1, k_r2, k_r3 = jax.random.split(key, 6)

    params = init_temporal_decoder(k_param, cfg)

    sample = jax.random.normal(
        k_in, (batch_frames, cfg["in_channels"], H0, W0), jnp.float32)
    image_only_indicator = jnp.zeros((batch_size, num_frames), jnp.float32)

    boc = cfg["block_out_channels"]
    # encoder residuals listed shallow -> deep; forward reverses them.
    encoder_residual = [
        jax.random.normal(k_r0, (num_frames, boc[0], 8 * H0, 8 * W0), jnp.float32),
        jax.random.normal(k_r1, (num_frames, boc[0], 4 * H0, 4 * W0), jnp.float32),
        jax.random.normal(k_r2, (num_frames, boc[1], 2 * H0, 2 * W0), jnp.float32),
        jax.random.normal(k_r3, (num_frames, boc[2], 1 * H0, 1 * W0), jnp.float32),
    ]

    out = temporal_decoder_forward(params, cfg, sample, image_only_indicator,
                                   num_frames=num_frames,
                                   encoder_residual=encoder_residual,
                                   start_frame=0)
    out = jax.block_until_ready(out)

    assert out.shape == (batch_frames, cfg["out_channels"], 8 * H0, 8 * W0), out.shape
    assert bool(jnp.all(jnp.isfinite(out)))
    print("KERNEL_OK")
</pallas_src>

<mosaic_0001>
module attributes {stable_mosaic.version = 11 : i64} {
  func.func @_conv3x3_kernel(%arg0: i32, %arg1: i32, %arg2: memref<1x1x6x4xbf16, #tpu.memory_space<vmem>>, %arg3: memref<1x1x6x4xbf16, #tpu.memory_space<vmem>>, %arg4: memref<1x1x6x4xbf16, #tpu.memory_space<vmem>>, %arg5: memref<3x3x4x128xbf16, #tpu.memory_space<vmem>>, %arg6: memref<1x128xf32, #tpu.memory_space<vmem>>, %arg7: memref<1x1x4x128xbf16, #tpu.memory_space<vmem>>) attributes {dimension_semantics = [#tpu.dimension_semantics<parallel>, #tpu.dimension_semantics<parallel>], iteration_bounds = array<i64: 2, 4>, scalar_prefetch = 0 : i64, scratch_operands = 0 : i64, tpu.core_type = #tpu.core_type<tc>, window_params = [{transform_indices = @transform_0, window_bounds = array<i64: 1, 1, 6, 4>}, {transform_indices = @transform_1, window_bounds = array<i64: 1, 1, 6, 4>}, {transform_indices = @transform_2, window_bounds = array<i64: 1, 1, 6, 4>}, {pipeline_mode = #tpu.pipeline_mode<synchronous>, transform_indices = @transform_3, window_bounds = array<i64: 3, 3, 4, 128>}, {pipeline_mode = #tpu.pipeline_mode<synchronous>, transform_indices = @transform_4, window_bounds = array<i64: 1, 128>}, {transform_indices = @transform_5, window_bounds = array<i64: 1, 1, 4, 128>}]} {
    %c0 = arith.constant 0 : index
    %c0_0 = arith.constant 0 : index
    %c0_1 = arith.constant 0 : index
    %c0_2 = arith.constant 0 : index
    %0 = vector.load %arg2[%c0, %c0_0, %c0_1, %c0_2] : memref<1x1x6x4xbf16, #tpu.memory_space<vmem>>, vector<1x1x4x4xbf16>
    %1 = vector.shape_cast %0 : vector<1x1x4x4xbf16> to vector<4x4xbf16>
    %c0_3 = arith.constant 0 : index
    %c0_4 = arith.constant 0 : index
    %c0_5 = arith.constant 0 : index
    %c0_6 = arith.constant 0 : index
    %2 = vector.load %arg5[%c0_3, %c0_4, %c0_5, %c0_6] : memref<3x3x4x128xbf16, #tpu.memory_space<vmem>>, vector<1x1x4x128xbf16>
    %3 = vector.shape_cast %2 : vector<1x1x4x128xbf16> to vector<4x128xbf16>
    %cst = arith.constant dense<0.000000e+00> : vector<4x128xf32>
    %4 = tpu.matmul %1, %3, %cst {dimension_numbers = #tpu.dot_dimension_numbers<[1], [0], [0], [1], [0, 0, 1, 1], [], []>} : vector<4x4xbf16>, vector<4x128xbf16>, vector<4x128xf32> -> vector<4x128xf32>
    %c0_7 = arith.constant 0 : index
    %c0_8 = arith.constant 0 : index
    %c1 = arith.constant 1 : index
    %c0_9 = arith.constant 0 : index
    %5 = vector.load %arg2[%c0_7, %c0_8, %c1, %c0_9] : memref<1x1x6x4xbf16, #tpu.memory_space<vmem>>, vector<1x1x4x4xbf16>
    %6 = vector.shape_cast %5 : vector<1x1x4x4xbf16> to vector<4x4xbf16>
    %c0_10 = arith.constant 0 : index
    %c1_11 = arith.constant 1 : index
    %c0_12 = arith.constant 0 : index
    %c0_13 = arith.constant 0 : index
    %7 = vector.load %arg5[%c0_10, %c1_11, %c0_12, %c0_13] : memref<3x3x4x128xbf16, #tpu.memory_space<vmem>>, vector<1x1x4x128xbf16>
    %8 = vector.shape_cast %7 : vector<1x1x4x128xbf16> to vector<4x128xbf16>
    %cst_14 = arith.constant dense<0.000000e+00> : vector<4x128xf32>
    %9 = tpu.matmul %6, %8, %cst_14 {dimension_numbers = #tpu.dot_dimension_numbers<[1], [0], [0], [1], [0, 0, 1, 1], [], []>} : vector<4x4xbf16>, vector<4x128xbf16>, vector<4x128xf32> -> vector<4x128xf32>
    %10 = arith.addf %4, %9 : vector<4x128xf32>
    %c0_15 = arith.constant 0 : index
    %c0_16 = arith.constant 0 : index
    %c2 = arith.constant 2 : index
    %c0_17 = arith.constant 0 : index
    %11 = vector.load %arg2[%c0_15, %c0_16, %c2, %c0_17] : memref<1x1x6x4xbf16, #tpu.memory_space<vmem>>, vector<1x1x4x4xbf16>
    %12 = vector.shape_cast %11 : vector<1x1x4x4xbf16> to vector<4x4xbf16>
    %c0_18 = arith.constant 0 : index
    %c2_19 = arith.constant 2 : index
    %c0_20 = arith.constant 0 : index
    %c0_21 = arith.constant 0 : index
    %13 = vector.load %arg5[%c0_18, %c2_19, %c0_20, %c0_21] : memref<3x3x4x128xbf16, #tpu.memory_space<vmem>>, vector<1x1x4x128xbf16>
    %14 = vector.shape_cast %13 : vector<1x1x4x128xbf16> to vector<4x128xbf16>
    %cst_22 = arith.constant dense<0.000000e+00> : vector<4x128xf32>
    %15 = tpu.matmul %12, %14, %cst_22 {dimension_numbers = #tpu.dot_dimension_numbers<[1], [0], [0], [1], [0, 0, 1, 1], [], []>} : vector<4x4xbf16>, vector<4x128xbf16>, vector<4x128xf32> -> vector<4x128xf32>
    %16 = arith.addf %10, %15 : vector<4x128xf32>
    %c0_23 = arith.constant 0 : index
    %c0_24 = arith.constant 0 : index
    %c0_25 = arith.constant 0 : index
    %c0_26 = arith.constant 0 : index
    %17 = vector.load %arg3[%c0_23, %c0_24, %c0_25, %c0_26] : memref<1x1x6x4xbf16, #tpu.memory_space<vmem>>, vector<1x1x4x4xbf16>
    %18 = vector.shape_cast %17 : vector<1x1x4x4xbf16> to vector<4x4xbf16>
    %c1_27 = arith.constant 1 : index
    %c0_28 = arith.constant 0 : index
    %c0_29 = arith.constant 0 : index
    %c0_30 = arith.constant 0 : index
    %19 = vector.load %arg5[%c1_27, %c0_28, %c0_29, %c0_30] : memref<3x3x4x128xbf16, #tpu.memory_space<vmem>>, vector<1x1x4x128xbf16>
    %20 = vector.shape_cast %19 : vector<1x1x4x128xbf16> to vector<4x128xbf16>
    %cst_31 = arith.constant dense<0.000000e+00> : vector<4x128xf32>
    %21 = tpu.matmul %18, %20, %cst_31 {dimension_numbers = #tpu.dot_dimension_numbers<[1], [0], [0], [1], [0, 0, 1, 1], [], []>} : vector<4x4xbf16>, vector<4x128xbf16>, vector<4x128xf32> -> vector<4x128xf32>
    %22 = arith.addf %16, %21 : vector<4x128xf32>
    %c0_32 = arith.constant 0 : index
    %c0_33 = arith.constant 0 : index
    %c1_34 = arith.constant 1 : index
    %c0_35 = arith.constant 0 : index
    %23 = vector.load %arg3[%c0_32, %c0_33, %c1_34, %c0_35] : memref<1x1x6x4xbf16, #tpu.memory_space<vmem>>, vector<1x1x4x4xbf16>
    %24 = vector.shape_cast %23 : vector<1x1x4x4xbf16> to vector<4x4xbf16>
    %c1_36 = arith.constant 1 : index
    %c1_37 = arith.constant 1 : index
    %c0_38 = arith.constant 0 : index
    %c0_39 = arith.constant 0 : index
    %25 = vector.load %arg5[%c1_36, %c1_37, %c0_38, %c0_39] : memref<3x3x4x128xbf16, #tpu.memory_space<vmem>>, vector<1x1x4x128xbf16>
    %26 = vector.shape_cast %25 : vector<1x1x4x128xbf16> to vector<4x128xbf16>
    %cst_40 = arith.constant dense<0.000000e+00> : vector<4x128xf32>
    %27 = tpu.matmul %24, %26, %cst_40 {dimension_numbers = #tpu.dot_dimension_numbers<[1], [0], [0], [1], [0, 0, 1, 1], [], []>} : vector<4x4xbf16>, vector<4x128xbf16>, vector<4x128xf32> -> vector<4x128xf32>
    %28 = arith.addf %22, %27 : vector<4x128xf32>
    %c0_41 = arith.constant 0 : index
    %c0_42 = arith.constant 0 : index
    %c2_43 = arith.constant 2 : index
    %c0_44 = arith.constant 0 : index
    %29 = vector.load %arg3[%c0_41, %c0_42, %c2_43, %c0_44] : memref<1x1x6x4xbf16, #tpu.memory_space<vmem>>, vector<1x1x4x4xbf16>
    %30 = vector.shape_cast %29 : vector<1x1x4x4xbf16> to vector<4x4xbf16>
    %c1_45 = arith.constant 1 : index
    %c2_46 = arith.constant 2 : index
    %c0_47 = arith.constant 0 : index
    %c0_48 = arith.constant 0 : index
    %31 = vector.load %arg5[%c1_45, %c2_46, %c0_47, %c0_48] : memref<3x3x4x128xbf16, #tpu.memory_space<vmem>>, vector<1x1x4x128xbf16>
    %32 = vector.shape_cast %31 : vector<1x1x4x128xbf16> to vector<4x128xbf16>
    %cst_49 = arith.constant dense<0.000000e+00> : vector<4x128xf32>
    %33 = tpu.matmul %30, %32, %cst_49 {dimension_numbers = #tpu.dot_dimension_numbers<[1], [0], [0], [1], [0, 0, 1, 1], [], []>} : vector<4x4xbf16>, vector<4x128xbf16>, vector<4x128xf32> -> vector<4x128xf32>
    %34 = arith.addf %28, %33 : vector<4x128xf32>
    %c0_50 = arith.constant 0 : index
    %c0_51 = arith.constant 0 : index
    %c0_52 = arith.constant 0 : index
    %c0_53 = arith.constant 0 : index
    %35 = vector.load %arg4[%c0_50, %c0_51, %c0_52, %c0_53] : memref<1x1x6x4xbf16, #tpu.memory_space<vmem>>, vector<1x1x4x4xbf16>
    %36 = vector.shape_cast %35 : vector<1x1x4x4xbf16> to vector<4x4xbf16>
    %c2_54 = arith.constant 2 : index
    %c0_55 = arith.constant 0 : index
    %c0_56 = arith.constant 0 : index
    %c0_57 = arith.constant 0 : index
    %37 = vector.load %arg5[%c2_54, %c0_55, %c0_56, %c0_57] : memref<3x3x4x128xbf16, #tpu.memory_space<vmem>>, vector<1x1x4x128xbf16>
    %38 = vector.shape_cast %37 : vector<1x1x4x128xbf16> to vector<4x128xbf16>
    %cst_58 = arith.constant dense<0.000000e+00> : vector<4x128xf32>
    %39 = tpu.matmul %36, %38, %cst_58 {dimension_numbers = #tpu.dot_dimension_numbers<[1], [0], [0], [1], [0, 0, 1, 1], [], []>} : vector<4x4xbf16>, vector<4x128xbf16>, vector<4x128xf32> -> vector<4x128xf32>
    %40 = arith.addf %34, %39 : vector<4x128xf32>
    %c0_59 = arith.constant 0 : index
    %c0_60 = arith.constant 0 : index
    %c1_61 = arith.constant 1 : index
    %c0_62 = arith.constant 0 : index
    %41 = vector.load %arg4[%c0_59, %c0_60, %c1_61, %c0_62] : memref<1x1x6x4xbf16, #tpu.memory_space<vmem>>, vector<1x1x4x4xbf16>
    %42 = vector.shape_cast %41 : vector<1x1x4x4xbf16> to vector<4x4xbf16>
    %c2_63 = arith.constant 2 : index
    %c1_64 = arith.constant 1 : index
    %c0_65 = arith.constant 0 : index
    %c0_66 = arith.constant 0 : index
    %43 = vector.load %arg5[%c2_63, %c1_64, %c0_65, %c0_66] : memref<3x3x4x128xbf16, #tpu.memory_space<vmem>>, vector<1x1x4x128xbf16>
    %44 = vector.shape_cast %43 : vector<1x1x4x128xbf16> to vector<4x128xbf16>
    %cst_67 = arith.constant dense<0.000000e+00> : vector<4x128xf32>
    %45 = tpu.matmul %42, %44, %cst_67 {dimension_numbers = #tpu.dot_dimension_numbers<[1], [0], [0], [1], [0, 0, 1, 1], [], []>} : vector<4x4xbf16>, vector<4x128xbf16>, vector<4x128xf32> -> vector<4x128xf32>
    %46 = arith.addf %40, %45 : vector<4x128xf32>
    %c0_68 = arith.constant 0 : index
    %c0_69 = arith.constant 0 : index
    %c2_70 = arith.constant 2 : index
    %c0_71 = arith.constant 0 : index
    %47 = vector.load %arg4[%c0_68, %c0_69, %c2_70, %c0_71] : memref<1x1x6x4xbf16, #tpu.memory_space<vmem>>, vector<1x1x4x4xbf16>
    %48 = vector.shape_cast %47 : vector<1x1x4x4xbf16> to vector<4x4xbf16>
    %c2_72 = arith.constant 2 : index
    %c2_73 = arith.constant 2 : index
    %c0_74 = arith.constant 0 : index
    %c0_75 = arith.constant 0 : index
    %49 = vector.load %arg5[%c2_72, %c2_73, %c0_74, %c0_75] : memref<3x3x4x128xbf16, #tpu.memory_space<vmem>>, vector<1x1x4x128xbf16>
    %50 = vector.shape_cast %49 : vector<1x1x4x128xbf16> to vector<4x128xbf16>
    %cst_76 = arith.constant dense<0.000000e+00> : vector<4x128xf32>
    %51 = tpu.matmul %48, %50, %cst_76 {dimension_numbers = #tpu.dot_dimension_numbers<[1], [0], [0], [1], [0, 0, 1, 1], [], []>} : vector<4x4xbf16>, vector<4x128xbf16>, vector<4x128xf32> -> vector<4x128xf32>
    %52 = arith.addf %46, %51 : vector<4x128xf32>
    %c0_77 = arith.constant 0 : index
    %c0_78 = arith.constant 0 : index
    %53 = vector.load %arg6[%c0_77, %c0_78] : memref<1x128xf32, #tpu.memory_space<vmem>>, vector<1x128xf32>
    %54 = vector.broadcast %53 : vector<1x128xf32> to vector<4x128xf32>
    %55 = arith.addf %52, %54 : vector<4x128xf32>
    %56 = arith.truncf %55 : vector<4x128xf32> to vector<4x128xbf16>
    %c0_79 = arith.constant 0 : index
    %c0_80 = arith.constant 0 : index
    %c0_81 = arith.constant 0 : index
    %c0_82 = arith.constant 0 : index
    %57 = vector.load %arg7[%c0_79, %c0_80, %c0_81, %c0_82] : memref<1x1x4x128xbf16, #tpu.memory_space<vmem>>, vector<1x1x4x128xbf16>
    %58 = vector.shape_cast %57 : vector<1x1x4x128xbf16> to vector<4x128xbf16>
    %59 = vector.shape_cast %56 : vector<4x128xbf16> to vector<1x1x4x128xbf16>
    tpu.vector_store %arg7[%c0_79, %c0_80, %c0_81, %c0_82], %59 {strides = array<i32>} : memref<1x1x4x128xbf16, #tpu.memory_space<vmem>>, vector<1x1x4x128xbf16>,
    return
  }
  func.func @transform_0(%arg0: i32, %arg1: i32) -> (i32, i32, i32, i32) {
    %c0_i32 = arith.constant 0 : i32
    %0 = arith.addi %arg1, %c0_i32 : i32
    %c0_i32_0 = arith.constant 0 : i32
    %c0_i32_1 = arith.constant 0 : i32
    %c0_i32_2 = arith.constant 0 : i32
    return %arg0, %0, %c0_i32_0, %c0_i32_1 : i32, i32, i32, i32
  }
  func.func @transform_1(%arg0: i32, %arg1: i32) -> (i32, i32, i32, i32) {
    %c1_i32 = arith.constant 1 : i32
    %0 = arith.addi %arg1, %c1_i32 : i32
    %c0_i32 = arith.constant 0 : i32
    %c0_i32_0 = arith.constant 0 : i32
    %c0_i32_1 = arith.constant 0 : i32
    return %arg0, %0, %c0_i32, %c0_i32_0 : i32, i32, i32, i32
  }
  func.func @transform_2(%arg0: i32, %arg1: i32) -> (i32, i32, i32, i32) {
    %c2_i32 = arith.constant 2 : i32
    %0 = arith.addi %arg1, %c2_i32 : i32
    %c0_i32 = arith.constant 0 : i32
    %c0_i32_0 = arith.constant 0 : i32
    %c0_i32_1 = arith.constant 0 : i32
    return %arg0, %0, %c0_i32, %c0_i32_0 : i32, i32, i32, i32
  }
  func.func @transform_3(%arg0: i32, %arg1: i32) -> (i32, i32, i32, i32) {
    %c0_i32 = arith.constant 0 : i32
    %c0_i32_0 = arith.constant 0 : i32
    %c0_i32_1 = arith.constant 0 : i32
    %c0_i32_2 = arith.constant 0 : i32
    %c0_i32_3 = arith.constant 0 : i32
    return %c0_i32, %c0_i32_0, %c0_i32_1, %c0_i32_2 : i32, i32, i32, i32
  }
  func.func @transform_4(%arg0: i32, %arg1: i32) -> (i32, i32) {
    %c0_i32 = arith.constant 0 : i32
    %c0_i32_0 = arith.constant 0 : i32
    %c0_i32_1 = arith.constant 0 : i32
    return %c0_i32, %c0_i32_0 : i32, i32
  }
  func.func @transform_5(%arg0: i32, %arg1: i32) -> (i32, i32, i32, i32) {
    %c0_i32 = arith.constant 0 : i32
    %c0_i32_0 = arith.constant 0 : i32
    %c0_i32_1 = arith.constant 0 : i32
    return %arg0, %arg1, %c0_i32, %c0_i32_0 : i32, i32, i32, i32
  }
}

</mosaic_0001>

<llo_original>
// kernel: conv2d_3x3.1
$region0: #{conv2d_3x3.1}
  #allocation0 [shape = 'u32[]', space=smem, size = 0x4, offset = 0x4, fixed_abs, tag = 'smem constant byte address 0x4 - core index']
  #allocation1 [shape = 'u32[72,128]{1,0:T(1,128)}', space=vmem, size = 0x9000, scoped, tag = 'internal scratch']
  %s0 = inlined_call_operand.vmem [shape: bf16[2,6,6,4], index: 0, kind: input, shape index: {}, may-alias: {0,1,2}]
  %s1 = inlined_call_operand.vmem [shape: bf16[2,6,6,4], index: 1, kind: input, shape index: {}, may-alias: {0,1,2}]
  %s2 = inlined_call_operand.vmem [shape: bf16[2,6,6,4], index: 2, kind: input, shape index: {}, may-alias: {0,1,2}]
  %s3 = inlined_call_operand.vmem [shape: bf16[3,3,4,128], index: 3, kind: input, shape index: {}]
  %s4 = inlined_call_operand.vmem [shape: f32[1,128], index: 4, kind: input, shape index: {}]
  %s5 = inlined_call_operand.hbm [shape: bf16[2,4,4,128], index: 5, kind: output, shape index: {}]
  %s6 = sld [smem:[#allocation0]]
  $region53: #{conv2d_3x3.1} parent=0
    _
  %s8 = ssub.s32 1, %s6
  %s9 = scalar_select 0, %s8, %s6
  $region1: #{conv2d_3x3.1} parent=0
    #allocation2 [shape = 'u8[2048]{0}', space=vmem, size = 0x800, scoped, tag = 'output window, operand 0']
    #allocation3 [shape = 's32[2]{0}', space=sflag, size = 0x8, scoped, tag = 'scoped memory for conv2d_3x3.1']
    %10 = vsyncpa [#allocation3], 0
    %s11 = scalar_lea.sflag [#allocation3], 1
    %12 = vsyncpa %s11, 0
    loop: start=0, step=1, limit=10
    $region2: #{conv2d_3x3.1} parent=1 // loop_pre_header
      _
    $region3: #{conv2d_3x3.1} parent=1 // loop_header
      %s14 = sphi 0, %s18
      %p15 = scmp.ge.s32.totalorder %s14, 10
      %s21 = sphi 0, %s33
      %s22 = sphi 0, %s29
      %s23 = sphi 0, %s21
      %s24 = sphi 0, %s22
      %s25 = sphi 0, %s23
      %s26 = sphi 0, %s24
      %s38 = sphi 0, %s40
      %s41 = sphi 0, %s38
      %s42 = sphi 0, %s41
      %s58 = sphi 0, %s42
      %s68 = sphi 0, %s70
      %s71 = sphi 0, %s68
      %s72 = sphi 0, %s71
      %s88 = sphi 0, %s72
      %s98 = sphi 0, %s100
      %s101 = sphi 0, %s98
      %s102 = sphi 0, %s101
      %s118 = sphi 0, %s102
      %s122 = sphi 0, %s122
      %s124 = sphi 0, %s122
      %s125 = sphi 0, %s124
      %s139 = sphi 0, %s125
      %s143 = sphi 0, %s143
      %s145 = sphi 0, %s143
      %s146 = sphi 0, %s145
      %s160 = sphi 0, %s146
      %s168 = sphi 0, %s170
      %s171 = sphi 0, %s168
      %s172 = sphi 0, %s171
      %s188 = sphi 0, %s172
    $region4: #{conv2d_3x3.1} parent=1 // loop_header_branch
      %17 = sbr.rel (%p15) target = $region8
    $region5: #{conv2d_3x3.1} parent=1 // loop_body
      %s19 = ssub.s32 %s14, 1
      %s20 = ssub.s32 %s14, 2
      %s27 = sadd.s32 1, %s22
      %p28 = scmp.ge.s32.totalorder %s27, 4
      %s29 = scalar_select %p28, 0, %s27
      %s30 = sadd.s32 1, %s21
      %s31 = scalar_select %p28, %s30, %s21
      %p32 = scmp.ge.s32.totalorder %s31, 2
      %s33 = scalar_select %p32, 0, %s31
      %s34 = ssub.s32 %s21, %s33
      %s35 = ssub.s32 %s22, %s29
      %s36 = sor.u32 %s34, %s35
      %p37 = scmp.eq.s32.totalorder %s36, 0
      %s39 = sadd.s32 %s38, 1
      %s40 = scalar_select %p37, %s38, %s39
      %p43 = pneg %p37
      %p44 = scmp.eq.s32.totalorder %s14, 7
      %p45 = por %p43, %p44
      %p46 = scmp.ne.s32.totalorder %s38, %s41
      %p47 = scmp.eq.s32.totalorder %s14, 0
      %p48 = por %p46, %p47
      %p49 = scmp.ne.s32.totalorder %s38, %s41
      %p50 = scmp.eq.s32.totalorder %s19, 7
      %p51 = por %p49, %p50
      %p52 = scmp.ne.s32.totalorder %s41, %s42
      %p53 = scmp.eq.s32.totalorder %s19, 0
      %p54 = por %p52, %p53
      %p55 = scmp.ne.s32.totalorder %s41, %s42
      %p56 = scmp.eq.s32.totalorder %s20, 7
      %p57 = por %p55, %p56
      %p59 = scmp.ne.s32.totalorder %s42, %s58
      %p60 = scmp.eq.s32.totalorder %s20, 0
      %p61 = por %p59, %p60
      %s62 = sadd.s32 %s22, 1
      %s63 = sadd.s32 %s29, 1
      %s64 = ssub.s32 %s21, %s33
      %s65 = ssub.s32 %s62, %s63
      %s66 = sor.u32 %s64, %s65
      %p67 = scmp.eq.s32.totalorder %s66, 0
      %s69 = sadd.s32 %s68, 1
      %s70 = scalar_select %p67, %s68, %s69
      %p73 = pneg %p67
      %p74 = scmp.eq.s32.totalorder %s14, 7
      %p75 = por %p73, %p74
      %p76 = scmp.ne.s32.totalorder %s68, %s71
      %p77 = scmp.eq.s32.totalorder %s14, 0
      %p78 = por %p76, %p77
      %p79 = scmp.ne.s32.totalorder %s68, %s71
      %p80 = scmp.eq.s32.totalorder %s19, 7
      %p81 = por %p79, %p80
      %p82 = scmp.ne.s32.totalorder %s71, %s72
      %p83 = scmp.eq.s32.totalorder %s19, 0
      %p84 = por %p82, %p83
      %p85 = scmp.ne.s32.totalorder %s71, %s72
      %p86 = scmp.eq.s32.totalorder %s20, 7
      %p87 = por %p85, %p86
      %p89 = scmp.ne.s32.totalorder %s72, %s88
      %p90 = scmp.eq.s32.totalorder %s20, 0
      %p91 = por %p89, %p90
      %s92 = sadd.s32 %s22, 2
      %s93 = sadd.s32 %s29, 2
      %s94 = ssub.s32 %s21, %s33
      %s95 = ssub.s32 %s92, %s93
      %s96 = sor.u32 %s94, %s95
      %p97 = scmp.eq.s32.totalorder %s96, 0
      %s99 = sadd.s32 %s98, 1
      %s100 = scalar_select %p97, %s98, %s99
      %p103 = pneg %p97
      %p104 = scmp.eq.s32.totalorder %s14, 7
      %p105 = por %p103, %p104
      %p106 = scmp.ne.s32.totalorder %s98, %s101
      %p107 = scmp.eq.s32.totalorder %s14, 0
      %p108 = por %p106, %p107
      %p109 = scmp.ne.s32.totalorder %s98, %s101
      %p110 = scmp.eq.s32.totalorder %s19, 7
      %p111 = por %p109, %p110
      %p112 = scmp.ne.s32.totalorder %s101, %s102
      %p113 = scmp.eq.s32.totalorder %s19, 0
      %p114 = por %p112, %p113
      %p115 = scmp.ne.s32.totalorder %s101, %s102
      %p116 = scmp.eq.s32.totalorder %s20, 7
      %p117 = por %p115, %p116
      %p119 = scmp.ne.s32.totalorder %s102, %s118
      %p120 = scmp.eq.s32.totalorder %s20, 0
      %p121 = por %p119, %p120
      %s123 = sadd.s32 %s122, 1
      %p126 = scmp.eq.s32.totalorder %s14, 7
      %p127 = scmp.ne.s32.totalorder %s122, %s124
      %p128 = scmp.eq.s32.totalorder %s14, 0
      %p129 = por %p127, %p128
      %p130 = scmp.ne.s32.totalorder %s122, %s124
      %p131 = scmp.eq.s32.totalorder %s19, 7
      %p132 = por %p130, %p131
      %p133 = scmp.ne.s32.totalorder %s124, %s125
      %p134 = scmp.eq.s32.totalorder %s19, 0
      %p135 = por %p133, %p134
      %p136 = scmp.ne.s32.totalorder %s124, %s125
      %p137 = scmp.eq.s32.totalorder %s20, 7
      %p138 = por %p136, %p137
      %p140 = scmp.ne.s32.totalorder %s125, %s139
      %p141 = scmp.eq.s32.totalorder %s20, 0
      %p142 = por %p140, %p141
      %s144 = sadd.s32 %s143, 1
      %p147 = scmp.eq.s32.totalorder %s14, 7
      %p148 = scmp.ne.s32.totalorder %s143, %s145
      %p149 = scmp.eq.s32.totalorder %s14, 0
      %p150 = por %p148, %p149
      %p151 = scmp.ne.s32.totalorder %s143, %s145
      %p152 = scmp.eq.s32.totalorder %s19, 7
      %p153 = por %p151, %p152
      %p154 = scmp.ne.s32.totalorder %s145, %s146
      %p155 = scmp.eq.s32.totalorder %s19, 0
      %p156 = por %p154, %p155
      %p157 = scmp.ne.s32.totalorder %s145, %s146
      %p158 = scmp.eq.s32.totalorder %s20, 7
      %p159 = por %p157, %p158
      %p161 = scmp.ne.s32.totalorder %s146, %s160
      %p162 = scmp.eq.s32.totalorder %s20, 0
      %p163 = por %p161, %p162
      %s164 = ssub.s32 %s21, %s33
      %s165 = ssub.s32 %s22, %s29
      %s166 = sor.u32 %s164, %s165
      %p167 = scmp.eq.s32.totalorder %s166, 0
      %s169 = sadd.s32 %s168, 1
      %s170 = scalar_select %p167, %s168, %s169
      %p173 = pneg %p167
      %p174 = scmp.eq.s32.totalorder %s14, 7
      %p175 = por %p173, %p174
      %p176 = scmp.ne.s32.totalorder %s168, %s171
      %p177 = scmp.eq.s32.totalorder %s14, 0
      %p178 = por %p176, %p177
      %p179 = scmp.ne.s32.totalorder %s168, %s171
      %p180 = scmp.eq.s32.totalorder %s19, 7
      %p181 = por %p179, %p180
      %p182 = scmp.ne.s32.totalorder %s171, %s172
      %p183 = scmp.eq.s32.totalorder %s19, 0
      %p184 = por %p182, %p183
      %p185 = scmp.ne.s32.totalorder %s171, %s172
      %p186 = scmp.eq.s32.totalorder %s20, 7
      %p187 = por %p185, %p186
      %p189 = scmp.ne.s32.totalorder %s172, %s188
      %p190 = scmp.eq.s32.totalorder %s20, 0
      %p191 = por %p189, %p190
      %p192 = scmp.le.s32.totalorder 1, %s14
      %p193 = scmp.lt.s32.totalorder %s14, 9
      %p194 = pnand %p192, %p193
      %p195 = pneg %p194
      // Predicated region
      $region9: #{conv2d_3x3.1} parent=5 // pred_check
        _
      $region10: #{conv2d_3x3.1} parent=5 // pred_check_branch
        %197 = sbr.rel (%p194) target = $region12
      $region11: #{conv2d_3x3.1} parent=5 // pred_region
        %s198 = ssub.s32 %s14, 1
        // Predicated region
        $region13: #{conv2d_3x3.1} parent=11 // pred_check
          %p199 = pneg %p135
        $region14: #{conv2d_3x3.1} parent=11 // pred_check_branch
          %201 = sbr.rel (%p199) target = $region16
        $region15: #{conv2d_3x3.1} parent=11 // pred_region
          _
        $region16: #{conv2d_3x3.1} parent=11 // pred_fallthru
          _
        // Predicated region
        $region17: #{conv2d_3x3.1} parent=11 // pred_check
          %p202 = pneg %p156
        $region18: #{conv2d_3x3.1} parent=11 // pred_check_branch
          %204 = sbr.rel (%p202) target = $region20
        $region19: #{conv2d_3x3.1} parent=11 // pred_region
          _
        $region20: #{conv2d_3x3.1} parent=11 // pred_fallthru
          _
      $region12: #{conv2d_3x3.1} parent=5 // pred_fallthru
        _
      %p205 = scmp.lt.s32.totalorder %s14, 8
      // Predicated region
      $region21: #{conv2d_3x3.1} parent=5 // pred_check
        %p206 = pneg %p205
      $region22: #{conv2d_3x3.1} parent=5 // pred_check_branch
        %208 = sbr.rel (%p206) target = $region24
      $region23: #{conv2d_3x3.1} parent=5 // pred_region
        // Predicated region
        $region25: #{conv2d_3x3.1} parent=23 // pred_check
          %p209 = pneg %p48
        $region26: #{conv2d_3x3.1} parent=23 // pred_check_branch
          %211 = sbr.rel (%p209) target = $region28
        $region27: #{conv2d_3x3.1} parent=23 // pred_region
          %p212 = scmp.lt.s32.totalorder %s21, 1
          %s213 = scalar_select %p212, %s21, 1
          %p214 = scmp.lt.s32.totalorder %s22, 5
          %s215 = scalar_select %p214, %s22, 5
          %s216 = smul.addr %s213, 6
          %s217 = sadd.s32 %s215, %s216
          %s218 = smul.addr %s217, 4
          %s219 = scalar_lea.vmem %s0, %s218
        $region28: #{conv2d_3x3.1} parent=23 // pred_fallthru
          _
        // Predicated region
        $region29: #{conv2d_3x3.1} parent=23 // pred_check
          %p220 = pneg %p78
        $region30: #{conv2d_3x3.1} parent=23 // pred_check_branch
          %222 = sbr.rel (%p220) target = $region32
        $region31: #{conv2d_3x3.1} parent=23 // pred_region
          %s223 = sadd.s32 %s22, 1
          %p224 = scmp.lt.s32.totalorder %s21, 1
          %s225 = scalar_select %p224, %s21, 1
          %p226 = scmp.lt.s32.totalorder %s223, 5
          %s227 = scalar_select %p226, %s223, 5
          %s228 = smul.addr %s225, 6
          %s229 = sadd.s32 %s227, %s228
          %s230 = smul.addr %s229, 4
          %s231 = scalar_lea.vmem %s1, %s230
          %s232 = sadd.s32 %s22, 1
        $region32: #{conv2d_3x3.1} parent=23 // pred_fallthru
          _
        // Predicated region
        $region33: #{conv2d_3x3.1} parent=23 // pred_check
          %p233 = pneg %p108
        $region34: #{conv2d_3x3.1} parent=23 // pred_check_branch
          %235 = sbr.rel (%p233) target = $region36
        $region35: #{conv2d_3x3.1} parent=23 // pred_region
          %s236 = sadd.s32 %s22, 2
          %p237 = scmp.lt.s32.totalorder %s21, 1
          %s238 = scalar_select %p237, %s21, 1
          %p239 = scmp.lt.s32.totalorder %s236, 5
          %s240 = scalar_select %p239, %s236, 5
          %s241 = smul.addr %s238, 6
          %s242 = sadd.s32 %s240, %s241
          %s243 = smul.addr %s242, 4
          %s244 = scalar_lea.vmem %s2, %s243
          %s245 = sadd.s32 %s22, 2
        $region36: #{conv2d_3x3.1} parent=23 // pred_fallthru
          _
      $region24: #{conv2d_3x3.1} parent=5 // pred_fallthru
        _
      %p246 = scmp.le.s32.totalorder 1, %s14
      %p247 = scmp.lt.s32.totalorder %s14, 9
      %p248 = pnand %p246, %p247
      %p249 = pneg %p248
      // Predicated region
      $region37: #{conv2d_3x3.1} parent=5 // pred_check
        _
      $region38: #{conv2d_3x3.1} parent=5 // pred_check_branch
        %251 = sbr.rel (%p248) target = $region40
      $region39: #{conv2d_3x3.1} parent=5 // pred_region
        %s252 = ssub.s32 %s14, 1
        %p253 = scmp.lt.s32.totalorder %s23, 1
        %s254 = scalar_select %p253, %s23, 1
        %p255 = scmp.lt.s32.totalorder %s24, 5
        %s256 = scalar_select %p255, %s24, 5
        %s257 = smul.addr %s254, 6
        %s258 = sadd.s32 %s256, %s257
        %s259 = smul.addr %s258, 4
        %s260 = scalar_lea.vmem %s0, %s259
        %p261 = pneg %p54
        %p262 = pneg %p51
        %s263 = sadd.s32 %s24, 1
        %p264 = scmp.lt.s32.totalorder %s23, 1
        %s265 = scalar_select %p264, %s23, 1
        %p266 = scmp.lt.s32.totalorder %s263, 5
        %s267 = scalar_select %p266, %s263, 5
        %s268 = smul.addr %s265, 6
        %s269 = sadd.s32 %s267, %s268
        %s270 = smul.addr %s269, 4
        %s271 = scalar_lea.vmem %s1, %s270
        %p272 = pneg %p84
        %p273 = pneg %p81
        %s274 = sadd.s32 %s24, 2
        %p275 = scmp.lt.s32.totalorder %s23, 1
        %s276 = scalar_select %p275, %s23, 1
        %p277 = scmp.lt.s32.totalorder %s274, 5
        %s278 = scalar_select %p277, %s274, 5
        %s279 = smul.addr %s276, 6
        %s280 = sadd.s32 %s278, %s279
        %s281 = smul.addr %s280, 4
        %s282 = scalar_lea.vmem %s2, %s281
        %p283 = pneg %p114
        %p284 = pneg %p111
        %p285 = pneg %p135
        %p286 = pneg %p132
        %p287 = pneg %p156
        %p288 = pneg %p153
        %p289 = pneg %p184
        %p290 = pneg %p181
        %s291 = sand.u32 %s171, 1
        %s292 = scalar_lea.sflag [#allocation3], %s291
        %s293 = sand.u32 %s171, 1
        %s294 = smul.addr %s293, 2
        %s295 = scalar_lea.vmem [#allocation2], %s294
        %p296 = scmp.lt.s32.totalorder %s23, 1
        %s297 = scalar_select %p296, %s23, 1
        %p298 = scmp.lt.s32.totalorder %s24, 5
        %s299 = scalar_select %p298, %s24, 5
        %s300 = smul.addr %s297, 6
        %s301 = sadd.s32 %s299, %s300
        %s302 = smul.addr %s301, 4
        %s303 = scalar_lea.vmem %s0, %s302
        %s304 = sadd.s32 %s24, 1
        %p305 = scmp.lt.s32.totalorder %s23, 1
        %s306 = scalar_select %p305, %s23, 1
        %p307 = scmp.lt.s32.totalorder %s304, 5
        %s308 = scalar_select %p307, %s304, 5
        %s309 = smul.addr %s306, 6
        %s310 = sadd.s32 %s308, %s309
        %s311 = smul.addr %s310, 4
        %s312 = scalar_lea.vmem %s1, %s311
        %s313 = sadd.s32 %s24, 1
        %s314 = sadd.s32 %s24, 2
        %p315 = scmp.lt.s32.totalorder %s23, 1
        %s316 = scalar_select %p315, %s23, 1
        %p317 = scmp.lt.s32.totalorder %s314, 5
        %s318 = scalar_select %p317, %s314, 5
        %s319 = smul.addr %s316, 6
        %s320 = sadd.s32 %s318, %s319
        %s321 = smul.addr %s320, 4
        %s322 = scalar_lea.vmem %s2, %s321
        %s323 = sadd.s32 %s24, 2
        %v325 = vld [vmem:[%s303] sm:$0x3]
        %v326 = vld [vmem:[%s3] sm:$0x3]
        %v327 = vld [vmem:[%s303] sm:$0x7]
        %s328 = scalar_lea.vmem %s3, 2
        %v329 = vld [vmem:[%s328] sm:$0x3]
        %v331 = vunpack.c.l.b16 %v327
        %v332 = vpack.c.b16 %v331, %v331
        %v334 = vshrl.u32 %v332, 16
        %v336 = vshll.u32 %v332, 16
        %v338 = vrot.slane %v336, 1
        %v339 = vor.u32 %v334, %v338
        %vm340 = vcmask 31744
        %v342 = vsel %vm340, %v339, 0
        %vm344 = vcmask 1041408
        %v346 = vsel %vm344, %v329, 0
        %348 = vmatpush.bf16.msra.mxu0 0
        %349 = vmatpush.bf16.msra.mxu0 0
        %350 = vmatpush.bf16.msra.mxu0 0
        %351 = vmatpush.bf16.msra.mxu0 0
        %352 = vmatpush.bf16.msra.mxu0 0
        %353 = vmatpush.bf16.msra.mxu0 0
        %354 = vmatpush.bf16.msra.mxu0 0
        %355 = vmatpush.bf16.msra.mxu0 %v346
        %356 = vmatmul.bf16.gmra.mxu0 %v342
        %v357 = vpop.f32.mrf.mxu0
        %v358 = vadd.f32 0.0, %v357
        %v359 = vpop.f32.mrf.mxu0
        %360 = vdwg.mxu0
        %v362 = vsel %vm340, %v325, 0
        %v365 = vsel %vm344, %v326, 0
        %367 = vmatpush.bf16.msra.mxu0 0
        %368 = vmatpush.bf16.msra.mxu0 0
        %369 = vmatpush.bf16.msra.mxu0 0
        %370 = vmatpush.bf16.msra.mxu0 0
        %371 = vmatpush.bf16.msra.mxu0 0
        %372 = vmatpush.bf16.msra.mxu0 0
        %373 = vmatpush.bf16.msra.mxu0 0
        %374 = vmatpush.bf16.msra.mxu0 %v365
        %375 = vmatmul.bf16.gmra.mxu0 %v362
        %v376 = vpop.f32.mrf.mxu0
        %v377 = vadd.f32 %v358, %v376
        %v378 = vpop.f32.mrf.mxu0
        %379 = vdwg.mxu0
        %v380 = vld [vmem:[%s303] sm:$0x6]
        %s381 = scalar_lea.vmem %s3, 4
        %v382 = vld [vmem:[%s381] sm:$0x3]
        %v384 = vunpack.c.l.b16 %v380
        %v385 = vpack.c.b16 %v384, %v384
        %v386 = vrot.slane %v385, 1
        %v388 = vsel %vm340, %v386, 0
        %v391 = vsel %vm344, %v382, 0
        %393 = vmatpush.bf16.msra.mxu0 0
        %394 = vmatpush.bf16.msra.mxu0 0
        %395 = vmatpush.bf16.msra.mxu0 0
        %396 = vmatpush.bf16.msra.mxu0 0
        %397 = vmatpush.bf16.msra.mxu0 0
        %398 = vmatpush.bf16.msra.mxu0 0
        %399 = vmatpush.bf16.msra.mxu0 0
        %400 = vmatpush.bf16.msra.mxu0 %v391
        %401 = vmatmul.bf16.gmra.mxu0 %v388
        %v402 = vpop.f32.mrf.mxu0
        %v403 = vadd.f32 0.0, %v402
        %v404 = vpop.f32.mrf.mxu0
        %405 = vdwg.mxu0
        %v406 = vadd.f32 %v377, %v403
        %v407 = vld [vmem:[%s312] sm:$0x3]
        %s408 = scalar_lea.vmem %s3, 6
        %v409 = vld [vmem:[%s408] sm:$0x3]
        %v411 = vsel %vm340, %v407, 0
        %v414 = vsel %vm344, %v409, 0
        %416 = vmatpush.bf16.msra.mxu0 0
        %417 = vmatpush.bf16.msra.mxu0 0
        %418 = vmatpush.bf16.msra.mxu0 0
        %419 = vmatpush.bf16.msra.mxu0 0
        %420 = vmatpush.bf16.msra.mxu0 0
        %421 = vmatpush.bf16.msra.mxu0 0
        %422 = vmatpush.bf16.msra.mxu0 0
        %423 = vmatpush.bf16.msra.mxu0 %v414
        %424 = vmatmul.bf16.gmra.mxu0 %v411
        %v425 = vpop.f32.mrf.mxu0
        %v426 = vadd.f32 0.0, %v425
        %v427 = vpop.f32.mrf.mxu0
        %428 = vdwg.mxu0
        %v429 = vadd.f32 %v406, %v426
        %v430 = vld [vmem:[%s312] sm:$0x7]
        %s431 = scalar_lea.vmem %s3, 8
        %v432 = vld [vmem:[%s431] sm:$0x3]
        %v434 = vunpack.c.l.b16 %v430
        %v435 = vpack.c.b16 %v434, %v434
        %v437 = vshrl.u32 %v435, 16
        %v439 = vshll.u32 %v435, 16
        %v441 = vrot.slane %v439, 1
        %v442 = vor.u32 %v437, %v441
        %v444 = vsel %vm340, %v442, 0
        %v447 = vsel %vm344, %v432, 0
        %449 = vmatpush.bf16.msra.mxu0 0
        %450 = vmatpush.bf16.msra.mxu0 0
        %451 = vmatpush.bf16.msra.mxu0 0
        %452 = vmatpush.bf16.msra.mxu0 0
        %453 = vmatpush.bf16.msra.mxu0 0
        %454 = vmatpush.bf16.msra.mxu0 0
        %455 = vmatpush.bf16.msra.mxu0 0
        %456 = vmatpush.bf16.msra.mxu0 %v447
        %457 = vmatmul.bf16.gmra.mxu0 %v444
        %v458 = vpop.f32.mrf.mxu0
        %v459 = vadd.f32 0.0, %v458
        %v460 = vpop.f32.mrf.mxu0
        %461 = vdwg.mxu0
        %v462 = vadd.f32 %v429, %v459
        %v463 = vld [vmem:[%s312] sm:$0x6]
        %s464 = scalar_lea.vmem %s3, 10
        %v465 = vld [vmem:[%s464] sm:$0x3]
        %v467 = vunpack.c.l.b16 %v463
        %v468 = vpack.c.b16 %v467, %v467
        %v469 = vrot.slane %v468, 1
        %v471 = vsel %vm340, %v469, 0
        %v474 = vsel %vm344, %v465, 0
        %476 = vmatpush.bf16.msra.mxu0 0
        %477 = vmatpush.bf16.msra.mxu0 0
        %478 = vmatpush.bf16.msra.mxu0 0
        %479 = vmatpush.bf16.msra.mxu0 0
        %480 = vmatpush.bf16.msra.mxu0 0
        %481 = vmatpush.bf16.msra.mxu0 0
        %482 = vmatpush.bf16.msra.mxu0 0
        %483 = vmatpush.bf16.msra.mxu0 %v474
        %484 = vmatmul.bf16.gmra.mxu0 %v471
        %v485 = vpop.f32.mrf.mxu0
        %v486 = vadd.f32 0.0, %v485
        %v487 = vpop.f32.mrf.mxu0
        %488 = vdwg.mxu0
        %v489 = vadd.f32 %v462, %v486
        %v490 = vld [vmem:[%s322] sm:$0x3]
        %s491 = scalar_lea.vmem %s3, 12
        %v492 = vld [vmem:[%s491] sm:$0x3]
        %v494 = vsel %vm340, %v490, 0
        %v497 = vsel %vm344, %v492, 0
        %499 = vmatpush.bf16.msra.mxu0 0
        %500 = vmatpush.bf16.msra.mxu0 0
        %501 = vmatpush.bf16.msra.mxu0 0
        %502 = vmatpush.bf16.msra.mxu0 0
        %503 = vmatpush.bf16.msra.mxu0 0
        %504 = vmatpush.bf16.msra.mxu0 0
        %505 = vmatpush.bf16.msra.mxu0 0
        %506 = vmatpush.bf16.msra.mxu0 %v497
        %507 = vmatmul.bf16.gmra.mxu0 %v494
        %v508 = vpop.f32.mrf.mxu0
        %v509 = vadd.f32 0.0, %v508
        %v510 = vpop.f32.mrf.mxu0
        %511 = vdwg.mxu0
        %v512 = vadd.f32 %v489, %v509
        %v513 = vld [vmem:[%s322] sm:$0x7]
        %s514 = scalar_lea.vmem %s3, 14
        %v515 = vld [vmem:[%s514] sm:$0x3]
        %v517 = vunpack.c.l.b16 %v513
        %v518 = vpack.c.b16 %v517, %v517
        %v520 = vshrl.u32 %v518, 16
        %v522 = vshll.u32 %v518, 16
        %v524 = vrot.slane %v522, 1
        %v525 = vor.u32 %v520, %v524
        %v527 = vsel %vm340, %v525, 0
        %v530 = vsel %vm344, %v515, 0
        %532 = vmatpush.bf16.msra.mxu0 0
        %533 = vmatpush.bf16.msra.mxu0 0
        %534 = vmatpush.bf16.msra.mxu0 0
        %535 = vmatpush.bf16.msra.mxu0 0
        %536 = vmatpush.bf16.msra.mxu0 0
        %537 = vmatpush.bf16.msra.mxu0 0
        %538 = vmatpush.bf16.msra.mxu0 0
        %539 = vmatpush.bf16.msra.mxu0 %v530
        %540 = vmatmul.bf16.gmra.mxu0 %v527
        %v541 = vpop.f32.mrf.mxu0
        %v542 = vadd.f32 0.0, %v541
        %v543 = vpop.f32.mrf.mxu0
        %544 = vdwg.mxu0
        %v545 = vadd.f32 %v512, %v542
        %v546 = vld [vmem:[%s322] sm:$0x6]
        %s547 = scalar_lea.vmem %s3, 16
        %v548 = vld [vmem:[%s547] sm:$0x3]
        %v550 = vunpack.c.l.b16 %v546
        %v551 = vpack.c.b16 %v550, %v550
        %v552 = vrot.slane %v551, 1
        %v554 = vsel %vm340, %v552, 0
        %v557 = vsel %vm344, %v548, 0
        %559 = vmatpush.bf16.msra.mxu0 0
        %560 = vmatpush.bf16.msra.mxu0 0
        %561 = vmatpush.bf16.msra.mxu0 0
        %562 = vmatpush.bf16.msra.mxu0 0
        %563 = vmatpush.bf16.msra.mxu0 0
        %564 = vmatpush.bf16.msra.mxu0 0
        %565 = vmatpush.bf16.msra.mxu0 0
        %566 = vmatpush.bf16.msra.mxu0 %v557
        %567 = vmatmul.bf16.gmra.mxu0 %v554
        %v568 = vpop.f32.mrf.mxu0
        %v569 = vadd.f32 0.0, %v568
        %v570 = vpop.f32.mrf.mxu0
        %571 = vdwg.mxu0
        %v572 = vadd.f32 %v545, %v569
        %v573 = vld [vmem:[%s4] sm:$0x1]
        %v575 = vperm.slane %v573, 0
        %v577 = vadd.f32 %v572, %v575
        %v578 = vpack.c.bf16 %v577, %v577
        %579 = vst [vmem:[%s295] sm:$0x3] %v578
        %s580 = sand.u32 %s171, 1
        %s581 = scalar_lea.sflag [#allocation3], %s580
        %s582 = sand.u32 %s171, 1
        %s583 = smul.addr %s582, 2
        %s584 = scalar_lea.vmem [#allocation2], %s583
        // Predicated region
        $region41: #{conv2d_3x3.1} parent=39 // pred_check
          %p585 = pneg %p181
        $region42: #{conv2d_3x3.1} parent=39 // pred_check_branch
          %587 = sbr.rel (%p585) target = $region44
        $region43: #{conv2d_3x3.1} parent=39 // pred_region
          %589 = vsyncadd %s581, 0
          %s590 = smul.addr %s23, 4
          %s591 = sadd.s32 %s24, %s590
          %s592 = smul.addr %s591, 2
          %s593 = scalar_lea.hbm %s5, %s592
          %s595 = sshll.u32 %s584, 4
          %s596 = int_to_ptr.vmem [resolvable:$true] %s595
          %s597 = sshll.u32 %s593, 4
          %s598 = int_to_ptr.hbm [resolvable:$true] %s597
          %600 = dma.vmem_to_hbm [thread:$0]  %s596, 32, %s598, %s581
        $region44: #{conv2d_3x3.1} parent=39 // pred_fallthru
          _
      $region40: #{conv2d_3x3.1} parent=5 // pred_fallthru
        _
      %p601 = scmp.le.s32.totalorder 2, %s14
      // Predicated region
      $region45: #{conv2d_3x3.1} parent=5 // pred_check
        %p602 = pneg %p601
      $region46: #{conv2d_3x3.1} parent=5 // pred_check_branch
        %604 = sbr.rel (%p602) target = $region48
      $region47: #{conv2d_3x3.1} parent=5 // pred_region
        %s605 = ssub.s32 %s14, 2
        // Predicated region
        $region49: #{conv2d_3x3.1} parent=47 // pred_check
          %p606 = pneg %p187
        $region50: #{conv2d_3x3.1} parent=47 // pred_check_branch
          %608 = sbr.rel (%p606) target = $region52
        $region51: #{conv2d_3x3.1} parent=47 // pred_region
          %s609 = sand.u32 %s172, 1
          %s610 = scalar_lea.sflag [#allocation3], %s609
          %s611 = sand.u32 %s172, 1
          %s612 = smul.addr %s611, 2
          %s613 = scalar_lea.vmem [#allocation2], %s612
          %615 = dma.done %s610, 32
        $region52: #{conv2d_3x3.1} parent=47 // pred_fallthru
          _
      $region48: #{conv2d_3x3.1} parent=5 // pred_fallthru
        _
    $region6: #{conv2d_3x3.1} parent=1 // loop_footer
      %s18 = sadd.s32 1, %s14
    $region7: #{conv2d_3x3.1} parent=1 // loop_footer_branch
      %13 = sbr.rel target = $region3
    $region8: #{conv2d_3x3.1} parent=1 // loop_exit
      _
    %616 = vsyncpa [#allocation3], 1
    %s617 = scalar_lea.sflag [#allocation3], 1
    %618 = vsyncpa %s617, 1

</llo_original>
